<compile_context>
chip_gen: v6e
topology: v6e:2x2x1
jax: 0.10.0
libtpu: 0.0.40
codegen_flags: <defaults>
</compile_context>

<pallas_src>
import jax
import jax.numpy as jnp
from jax.experimental import pallas as pl
from jax.experimental.pallas import tpu as pltpu

# Lane-dense padded feature sizes.
D_IN_PAD = 8     # real in_dim (6)  -> 8  (sublane multiple; K of 1st matmul)
H1_PAD = 128     # hidden 100       -> 128
H2_PAD = 128     # hidden 40        -> 128
D_OUT_PAD = 128  # real out_dim (9) -> 128 (lane-dense store path)


def _round_up(n, m):
    return ((n + m - 1) // m) * m


def mlp_kernel(x_ref, w1_ref, w23_ref, b_ref, o_ref):
    b = b_ref[...]                      # (3, 128) f32, VMEM-resident
    # Layer 1: (TB, 8) @ (8, 128)  -> bias + tanh in f32
    h = jnp.dot(x_ref[...], w1_ref[...], preferred_element_type=jnp.float32)
    h = jnp.tanh(h + b[0:1, :])
    # Layer 2: (TB, 128) @ (128, 128) -> bias + tanh in f32
    h = jnp.dot(h.astype(w23_ref.dtype), w23_ref[0],
                preferred_element_type=jnp.float32)
    h = jnp.tanh(h + b[1:2, :])
    # Layer 3: (TB, 128) @ (128, 128) + bias
    h = jnp.dot(h.astype(w23_ref.dtype), w23_ref[1],
                preferred_element_type=jnp.float32)
    o_ref[...] = (h + b[2:3, :]).astype(o_ref.dtype)


def model_torch_forward(x, params, *, block_b=512, matmul_dtype=jnp.float32):
    """x: (B, d_in) float32. Returns (B, d_out) float32.

    block_b: batch tile (multiple of 8). 512 is safe on v5e/v6e (128 MiB VMEM)
    and v7x (64 MiB VMEM): per-step buffers are well under 1 MiB.
    matmul_dtype: jnp.float32 or jnp.bfloat16 for the MXU inputs (accumulation
    and elementwise always f32).
    """
    w1, b1, w2, b2, w3, b3 = (params["w1"], params["b1"], params["w2"],
                              params["b2"], params["w3"], params["b3"])
    B, d_in = x.shape
    d_out = w3.shape[1]
    dt = matmul_dtype

    # Batch tiling.
    tb = max(8, min(int(block_b), _round_up(B, 8)))
    b_pad = _round_up(B, tb)
    grid = (b_pad // tb,)

    # --- zero-pad to lane-dense shapes (exact on the real rows/cols) ---
    def pad2(a, r, c, dtype):
        out = jnp.zeros((r, c), dtype)
        return out.at[:a.shape[0], :a.shape[1]].set(a.astype(dtype))

    xp = pad2(x, b_pad, D_IN_PAD, dt)                       # (B_pad, 8)
    w1p = pad2(w1, D_IN_PAD, H1_PAD, dt)                    # (8, 128)
    w23p = jnp.stack([pad2(w2, H1_PAD, H2_PAD, dt),         # (2, 128, 128)
                      pad2(w3, H2_PAD, D_OUT_PAD, dt)])
    bp = jnp.concatenate([pad2(b1, 1, D_OUT_PAD, jnp.float32),
                          pad2(b2, 1, D_OUT_PAD, jnp.float32),
                          pad2(b3, 1, D_OUT_PAD, jnp.float32)], axis=0)  # (3,128)

    itemsize = jnp.dtype(dt).itemsize
    cost = pl.CostEstimate(
        flops=2 * b_pad * (D_IN_PAD * H1_PAD + H1_PAD * H2_PAD
                           + H2_PAD * D_OUT_PAD),
        transcendentals=b_pad * (H1_PAD + H2_PAD),
        bytes_accessed=(xp.size + w1p.size + w23p.size) * itemsize
                       + bp.size * 4 + b_pad * D_OUT_PAD * 4,
    )

    out = pl.pallas_call(
        mlp_kernel,
        out_shape=jax.ShapeDtypeStruct((b_pad, D_OUT_PAD), jnp.float32),
        grid=grid,
        in_specs=[
            pl.BlockSpec((tb, D_IN_PAD), lambda i: (i, 0)),          # x tile
            pl.BlockSpec((D_IN_PAD, H1_PAD), lambda i: (0, 0)),      # w1 resident
            pl.BlockSpec((2, H1_PAD, H2_PAD), lambda i: (0, 0, 0)),  # w2|w3 resident
            pl.BlockSpec((3, D_OUT_PAD), lambda i: (0, 0)),          # biases resident
        ],
        out_specs=pl.BlockSpec((tb, D_OUT_PAD), lambda i: (i, 0)),
        compiler_params=pltpu.CompilerParams(
            dimension_semantics=("parallel",)),
        cost_estimate=cost,
    )(xp, w1p, w23p, bp)

    return out[:B, :d_out]


def init_params(key, d_in, d_out):
    """Deterministic init mimicking torch.nn.Linear default U(-1/sqrt(fan_in), +)."""
    dims = [(d_in, 100), (100, 40), (40, d_out)]
    params = {}
    for i, (fin, fout) in enumerate(dims, start=1):
        key, kw, kb = jax.random.split(key, 3)
        bound = 1.0 / jnp.sqrt(jnp.float32(fin))
        params[f"w{i}"] = jax.random.uniform(
            kw, (fin, fout), jnp.float32, -bound, bound)
        params[f"b{i}"] = jax.random.uniform(
            kb, (1, fout), jnp.float32, -bound, bound)
    return params


if __name__ == "__main__":
    # labels_in = to_optimize params + ['time'] -> 6 input features
    # labels_out = elements_to_trace            -> 9 output features
    D_IN, D_OUT, BATCH = 6, 9, 8

    key = jax.random.PRNGKey(0)
    key, kx = jax.random.split(key)
    x = jax.random.normal(kx, (BATCH, D_IN), jnp.float32)

    params = init_params(key, D_IN, D_OUT)

    y = model_torch_forward(x, params)
    y = jax.block_until_ready(y)

    # Pure-JAX reference check of the fused, padded kernel.
    ref = jnp.tanh(x @ params["w1"] + params["b1"])
    ref = jnp.tanh(ref @ params["w2"] + params["b2"])
    ref = ref @ params["w3"] + params["b3"]
    assert y.shape == (BATCH, D_OUT)
    assert jnp.allclose(y, ref, atol=1e-5, rtol=1e-5)

    # Also exercise a batch that actually uses the grid (multiple tiles,
    # non-multiple-of-tile size) to validate the batch tiling + padding path.
    key, kx2 = jax.random.split(key)
    x_big = jax.random.normal(kx2, (1000, D_IN), jnp.float32)
    y_big = jax.block_until_ready(
        model_torch_forward(x_big, params, block_b=256))
    ref_big = jnp.tanh(x_big @ params["w1"] + params["b1"])
    ref_big = jnp.tanh(ref_big @ params["w2"] + params["b2"])
    ref_big = ref_big @ params["w3"] + params["b3"]
    assert y_big.shape == (1000, D_OUT)
    assert jnp.allclose(y_big, ref_big, atol=1e-5, rtol=1e-5)

    print("KERNEL_OK")
</pallas_src>

<mosaic_0001>
module attributes {stable_mosaic.version = 11 : i64} {
  func.func @mlp_kernel(%arg0: i32, %arg1: memref<8x8xf32, #tpu.memory_space<vmem>>, %arg2: memref<8x128xf32, #tpu.memory_space<vmem>>, %arg3: memref<2x128x128xf32, #tpu.memory_space<vmem>>, %arg4: memref<3x128xf32, #tpu.memory_space<vmem>>, %arg5: memref<8x128xf32, #tpu.memory_space<vmem>>) attributes {dimension_semantics = [#tpu.dimension_semantics<parallel>], iteration_bounds = array<i64: 1>, scalar_prefetch = 0 : i64, scratch_operands = 0 : i64, tpu.core_type = #tpu.core_type<tc>, window_params = [{transform_indices = @transform_0, window_bounds = array<i64: 8, 8>}, {pipeline_mode = #tpu.pipeline_mode<synchronous>, transform_indices = @transform_1, window_bounds = array<i64: 8, 128>}, {pipeline_mode = #tpu.pipeline_mode<synchronous>, transform_indices = @transform_2, window_bounds = array<i64: 2, 128, 128>}, {pipeline_mode = #tpu.pipeline_mode<synchronous>, transform_indices = @transform_3, window_bounds = array<i64: 3, 128>}, {transform_indices = @transform_4, window_bounds = array<i64: 8, 128>}]} {
    %c0 = arith.constant 0 : index
    %c0_0 = arith.constant 0 : index
    %0 = vector.load %arg4[%c0, %c0_0] : memref<3x128xf32, #tpu.memory_space<vmem>>, vector<3x128xf32>
    %c0_1 = arith.constant 0 : index
    %c0_2 = arith.constant 0 : index
    %1 = vector.load %arg1[%c0_1, %c0_2] : memref<8x8xf32, #tpu.memory_space<vmem>>, vector<8x8xf32>
    %c0_3 = arith.constant 0 : index
    %c0_4 = arith.constant 0 : index
    %2 = vector.load %arg2[%c0_3, %c0_4] : memref<8x128xf32, #tpu.memory_space<vmem>>, vector<8x128xf32>
    %cst = arith.constant dense<0.000000e+00> : vector<8x128xf32>
    %3 = tpu.matmul %1, %2, %cst {dimension_numbers = #tpu.dot_dimension_numbers<[1], [0], [0], [1], [0, 0, 1, 1], [], []>} : vector<8x8xf32>, vector<8x128xf32>, vector<8x128xf32> -> vector<8x128xf32>
    %4 = vector.extract_strided_slice %0 {offsets = [0, 0], sizes = [1, 128], strides = [1, 1]} : vector<3x128xf32> to vector<1x128xf32>
    %5 = vector.broadcast %4 : vector<1x128xf32> to vector<8x128xf32>
    %6 = arith.addf %3, %5 : vector<8x128xf32>
    %7 = math.tanh %6 : vector<8x128xf32>
    %c0_5 = arith.constant 0 : index
    %c0_6 = arith.constant 0 : index
    %c0_7 = arith.constant 0 : index
    %8 = vector.load %arg3[%c0_5, %c0_6, %c0_7] : memref<2x128x128xf32, #tpu.memory_space<vmem>>, vector<1x128x128xf32>
    %9 = vector.shape_cast %8 : vector<1x128x128xf32> to vector<128x128xf32>
    %cst_8 = arith.constant dense<0.000000e+00> : vector<8x128xf32>
    %10 = tpu.matmul %7, %9, %cst_8 {dimension_numbers = #tpu.dot_dimension_numbers<[1], [0], [0], [1], [0, 0, 1, 1], [], []>} : vector<8x128xf32>, vector<128x128xf32>, vector<8x128xf32> -> vector<8x128xf32>
    %11 = vector.extract_strided_slice %0 {offsets = [1, 0], sizes = [1, 128], strides = [1, 1]} : vector<3x128xf32> to vector<1x128xf32>
    %12 = vector.broadcast %11 : vector<1x128xf32> to vector<8x128xf32>
    %13 = arith.addf %10, %12 : vector<8x128xf32>
    %14 = math.tanh %13 : vector<8x128xf32>
    %c1 = arith.constant 1 : index
    %c0_9 = arith.constant 0 : index
    %c0_10 = arith.constant 0 : index
    %15 = vector.load %arg3[%c1, %c0_9, %c0_10] : memref<2x128x128xf32, #tpu.memory_space<vmem>>, vector<1x128x128xf32>
    %16 = vector.shape_cast %15 : vector<1x128x128xf32> to vector<128x128xf32>
    %cst_11 = arith.constant dense<0.000000e+00> : vector<8x128xf32>
    %17 = tpu.matmul %14, %16, %cst_11 {dimension_numbers = #tpu.dot_dimension_numbers<[1], [0], [0], [1], [0, 0, 1, 1], [], []>} : vector<8x128xf32>, vector<128x128xf32>, vector<8x128xf32> -> vector<8x128xf32>
    %18 = vector.extract_strided_slice %0 {offsets = [2, 0], sizes = [1, 128], strides = [1, 1]} : vector<3x128xf32> to vector<1x128xf32>
    %19 = vector.broadcast %18 : vector<1x128xf32> to vector<8x128xf32>
    %20 = arith.addf %17, %19 : vector<8x128xf32>
    %c0_12 = arith.constant 0 : index
    %c0_13 = arith.constant 0 : index
    %21 = vector.load %arg5[%c0_12, %c0_13] : memref<8x128xf32, #tpu.memory_space<vmem>>, vector<8x128xf32>
    tpu.vector_store %arg5[%c0_12, %c0_13], %20 {strides = array<i32>} : memref<8x128xf32, #tpu.memory_space<vmem>>, vector<8x128xf32>,
    return
  }
  func.func @transform_0(%arg0: i32) -> (i32, i32) {
    %c0_i32 = arith.constant 0 : i32
    %c0_i32_0 = arith.constant 0 : i32
    return %arg0, %c0_i32 : i32, i32
  }
  func.func @transform_1(%arg0: i32) -> (i32, i32) {
    %c0_i32 = arith.constant 0 : i32
    %c0_i32_0 = arith.constant 0 : i32
    %c0_i32_1 = arith.constant 0 : i32
    return %c0_i32, %c0_i32_0 : i32, i32
  }
  func.func @transform_2(%arg0: i32) -> (i32, i32, i32) {
    %c0_i32 = arith.constant 0 : i32
    %c0_i32_0 = arith.constant 0 : i32
    %c0_i32_1 = arith.constant 0 : i32
    %c0_i32_2 = arith.constant 0 : i32
    return %c0_i32, %c0_i32_0, %c0_i32_1 : i32, i32, i32
  }
  func.func @transform_3(%arg0: i32) -> (i32, i32) {
    %c0_i32 = arith.constant 0 : i32
    %c0_i32_0 = arith.constant 0 : i32
    %c0_i32_1 = arith.constant 0 : i32
    return %c0_i32, %c0_i32_0 : i32, i32
  }
  func.func @transform_4(%arg0: i32) -> (i32, i32) {
    %c0_i32 = arith.constant 0 : i32
    %c0_i32_0 = arith.constant 0 : i32
    return %arg0, %c0_i32 : i32, i32
  }
}

</mosaic_0001>

<llo_original>
// kernel: tpu_custom_call.1
$region0: #{tpu_custom_call.1}
  #allocation0 [shape = 'u32[]', space=smem, size = 0x4, offset = 0x4, fixed_abs, tag = 'smem constant byte address 0x4 - core index']
  #allocation1 [shape = 'u32[144,128]{1,0:T(1,128)}', space=vmem, size = 0x12000, scoped, tag = 'internal scratch']
  %s0 = inlined_call_operand.hbm [shape: f32[8,8], index: 0, kind: input, shape index: {}]
  %s1 = inlined_call_operand.hbm [shape: f32[8,128], index: 1, kind: input, shape index: {}]
  %s2 = inlined_call_operand.hbm [shape: f32[2,128,128], index: 2, kind: input, shape index: {}]
  %s3 = inlined_call_operand.vmem [shape: f32[3,128], index: 3, kind: input, shape index: {}]
  %s4 = inlined_call_operand.hbm [shape: f32[8,128], index: 4, kind: output, shape index: {}]
  %s5 = sld [smem:[#allocation0]]
  $region38: #{tpu_custom_call.1} parent=0
    _
  %s7 = ssub.s32 1, %s5
  %s8 = scalar_select 0, %s7, %s5
  $region1: #{tpu_custom_call.1} parent=0
    #allocation2 [shape = 'u8[4096]{0}', space=vmem, size = 0x1000, scoped, tag = 'input window, operand 0, single buffered']
    #allocation3 [shape = 's32[1]{0}', space=sflag, size = 0x4, scoped, tag = 'scoped memory for tpu_custom_call.1']
    #allocation4 [shape = 's32[1]{0}', space=sflag, size = 0x4, scoped, tag = 'scoped memory for tpu_custom_call.1']
    #allocation5 [shape = 'u8[4096]{0}', space=vmem, size = 0x1000, scoped, tag = 'input window, operand 1, single buffered']
    #allocation6 [shape = 's32[1]{0}', space=sflag, size = 0x4, scoped, tag = 'scoped memory for tpu_custom_call.1']
    #allocation7 [shape = 'u8[131072]{0}', space=vmem, size = 0x20000, scoped, tag = 'input window, operand 2, single buffered']
    #allocation8 [shape = 'u8[4096]{0}', space=vmem, size = 0x1000, scoped, tag = 'output window, operand 0, single buffered']
    %9 = vsyncpa [#allocation3], 0
    %10 = vsyncpa [#allocation6], 0
    %11 = vsyncpa [#allocation4], 0
    // Predicated region
    $region2: #{tpu_custom_call.1} parent=1 // pred_check
      _
    $region3: #{tpu_custom_call.1} parent=1 // pred_check_branch
      %13 = sbr.rel (0) target = $region5
    $region4: #{tpu_custom_call.1} parent=1 // pred_region
      %s15 = ssub.s32 128, 128
      %16 = vsyncadd [#allocation3], %s15
      %s18 = sshll.u32 [#allocation2], 4
      %s19 = int_to_ptr.vmem [resolvable:$true] %s18
      %21 = dma.hbm_to_vmem [thread:$0]  %s0, 128, %s19, [#allocation3]
    $region5: #{tpu_custom_call.1} parent=1 // pred_fallthru
      _
    // Predicated region
    $region6: #{tpu_custom_call.1} parent=1 // pred_check
      _
    $region7: #{tpu_custom_call.1} parent=1 // pred_check_branch
      %23 = sbr.rel (0) target = $region9
    $region8: #{tpu_custom_call.1} parent=1 // pred_region
      %s25 = ssub.s32 128, 128
      %26 = vsyncadd [#allocation6], %s25
      %s28 = sshll.u32 [#allocation5], 4
      %s29 = int_to_ptr.vmem [resolvable:$true] %s28
      %31 = dma.hbm_to_vmem [thread:$0]  %s1, 128, %s29, [#allocation6]
    $region9: #{tpu_custom_call.1} parent=1 // pred_fallthru
      _
    // Predicated region
    $region10: #{tpu_custom_call.1} parent=1 // pred_check
      _
    $region11: #{tpu_custom_call.1} parent=1 // pred_check_branch
      %33 = sbr.rel (0) target = $region13
    $region12: #{tpu_custom_call.1} parent=1 // pred_region
      %s35 = ssub.s32 4096, 4096
      %36 = vsyncadd [#allocation6], %s35
      %s37 = sshll.u32 [#allocation7], 4
      %s38 = int_to_ptr.vmem [resolvable:$true] %s37
      %43 = dma.hbm_to_vmem [thread:$0]  %s2, 4096, %s38, [#allocation6], 128, 128, 8
    $region13: #{tpu_custom_call.1} parent=1 // pred_fallthru
      _
    // Predicated region
    $region14: #{tpu_custom_call.1} parent=1 // pred_check
      _
    $region15: #{tpu_custom_call.1} parent=1 // pred_check_branch
      %45 = sbr.rel (0) target = $region17
    $region16: #{tpu_custom_call.1} parent=1 // pred_region
      _
    $region17: #{tpu_custom_call.1} parent=1 // pred_fallthru
      _
    // Predicated region
    $region18: #{tpu_custom_call.1} parent=1 // pred_check
      _
    $region19: #{tpu_custom_call.1} parent=1 // pred_check_branch
      %47 = sbr.rel (0) target = $region21
    $region20: #{tpu_custom_call.1} parent=1 // pred_region
      %48 = dma.done [#allocation3], 128
    $region21: #{tpu_custom_call.1} parent=1 // pred_fallthru
      _
    // Predicated region
    $region22: #{tpu_custom_call.1} parent=1 // pred_check
      _
    $region23: #{tpu_custom_call.1} parent=1 // pred_check_branch
      %50 = sbr.rel (0) target = $region25
    $region24: #{tpu_custom_call.1} parent=1 // pred_region
      %51 = dma.done [#allocation6], 128
    $region25: #{tpu_custom_call.1} parent=1 // pred_fallthru
      _
    // Predicated region
    $region26: #{tpu_custom_call.1} parent=1 // pred_check
      _
    $region27: #{tpu_custom_call.1} parent=1 // pred_check_branch
      %53 = sbr.rel (0) target = $region29
    $region28: #{tpu_custom_call.1} parent=1 // pred_region
      %54 = dma.done [#allocation6], 4096
    $region29: #{tpu_custom_call.1} parent=1 // pred_fallthru
      _
    %v55 = vld [vmem:[%s3] sm:$0x7]
    %v56 = vld [vmem:[#allocation2] sm:$0xff]
    %v57 = vld [vmem:[#allocation5] sm:$0xff]
    %v58 = vlaneseq
    %v59 = vshrl.u32 %v58, 7
    %v60 = vsub.s32 0, %v59
    %v61 = vrot.slane %v55, %v60
    %vm62 = vcmask 64512
    %v64 = vsel %vm62, %v56, 0
    %66 = vmatprep.subr.mxu0 0.0
    %67 = vmatpush1.msra.mxu0 0.0
    %68 = vmatprep.subr.mxu0 0.0
    %69 = vmatpush1.msra.mxu0 0.0
    %70 = vmatprep.subr.mxu0 0.0
    %71 = vmatpush1.msra.mxu0 0.0
    %72 = vmatprep.subr.mxu0 0.0
    %73 = vmatpush1.msra.mxu0 0.0
    %74 = vmatprep.subr.mxu0 0.0
    %75 = vmatpush1.msra.mxu0 0.0
    %76 = vmatprep.subr.mxu0 0.0
    %77 = vmatpush1.msra.mxu0 0.0
    %78 = vmatprep.subr.mxu0 0.0
    %79 = vmatpush1.msra.mxu0 0.0
    %80 = vmatprep.subr.mxu0 0.0
    %81 = vmatpush1.msra.mxu0 0.0
    %82 = vmatprep.subr.mxu0 0.0
    %83 = vmatpush1.msra.mxu0 0.0
    %84 = vmatprep.subr.mxu0 0.0
    %85 = vmatpush1.msra.mxu0 0.0
    %86 = vmatprep.subr.mxu0 0.0
    %87 = vmatpush1.msra.mxu0 0.0
    %88 = vmatprep.subr.mxu0 0.0
    %89 = vmatpush1.msra.mxu0 0.0
    %90 = vmatprep.subr.mxu0 0.0
    %91 = vmatpush1.msra.mxu0 0.0
    %92 = vmatprep.subr.mxu0 0.0
    %93 = vmatpush1.msra.mxu0 0.0
    %94 = vmatprep.subr.mxu0 0.0
    %95 = vmatpush1.msra.mxu0 0.0
    %96 = vmatprep.subr.mxu0 0.0
    %97 = vmatpush1.msra.mxu0 %v57
    %98 = vmatprep.subr.mxu0 0.0
    %99 = vmatpush2.msra.mxu0 0.0
    %100 = vmatprep.subr.mxu0 0.0
    %101 = vmatpush2.msra.mxu0 0.0
    %102 = vmatprep.subr.mxu0 0.0
    %103 = vmatpush2.msra.mxu0 0.0
    %104 = vmatprep.subr.mxu0 0.0
    %105 = vmatpush2.msra.mxu0 0.0
    %106 = vmatprep.subr.mxu0 0.0
    %107 = vmatpush2.msra.mxu0 0.0
    %108 = vmatprep.subr.mxu0 0.0
    %109 = vmatpush2.msra.mxu0 0.0
    %110 = vmatprep.subr.mxu0 0.0
    %111 = vmatpush2.msra.mxu0 0.0
    %112 = vmatprep.subr.mxu0 0.0
    %113 = vmatpush2.msra.mxu0 0.0
    %114 = vmatprep.subr.mxu0 0.0
    %115 = vmatpush2.msra.mxu0 0.0
    %116 = vmatprep.subr.mxu0 0.0
    %117 = vmatpush2.msra.mxu0 0.0
    %118 = vmatprep.subr.mxu0 0.0
    %119 = vmatpush2.msra.mxu0 0.0
    %120 = vmatprep.subr.mxu0 0.0
    %121 = vmatpush2.msra.mxu0 0.0
    %122 = vmatprep.subr.mxu0 0.0
    %123 = vmatpush2.msra.mxu0 0.0
    %124 = vmatprep.subr.mxu0 0.0
    %125 = vmatpush2.msra.mxu0 0.0
    %126 = vmatprep.subr.mxu0 0.0
    %127 = vmatpush2.msra.mxu0 0.0
    %128 = vmatprep.subr.mxu0 0.0
    %129 = vmatpush2.msra.mxu0 0.0
    %130 = vmatprep.mubr.f32.mxu0 0.0
    %131 = vmatmul.mubr.f32.gmra.mxu0 %v64
    %v132 = vpop.f32.mrf.mxu0
    %v133 = vadd.f32 %v61, %v132
    %v134 = vpop.f32.mrf.mxu0
    %135 = vdwg.mxu0
    %v136 = vtanh.pop %v133
    %v137 = vld [vmem:[#allocation7] sm:$0xff]
    %v138 = vld [vmem:[#allocation7 + $0x8] sm:$0xff]
    %v139 = vld [vmem:[#allocation7 + $0x10] sm:$0xff]
    %v140 = vld [vmem:[#allocation7 + $0x18] sm:$0xff]
    %v141 = vld [vmem:[#allocation7 + $0x20] sm:$0xff]
    %v142 = vld [vmem:[#allocation7 + $0x28] sm:$0xff]
    %v143 = vld [vmem:[#allocation7 + $0x30] sm:$0xff]
    %v144 = vld [vmem:[#allocation7 + $0x38] sm:$0xff]
    %v145 = vld [vmem:[#allocation7 + $0x40] sm:$0xff]
    %v146 = vld [vmem:[#allocation7 + $0x48] sm:$0xff]
    %v147 = vld [vmem:[#allocation7 + $0x50] sm:$0xff]
    %v148 = vld [vmem:[#allocation7 + $0x58] sm:$0xff]
    %v149 = vld [vmem:[#allocation7 + $0x60] sm:$0xff]
    %v150 = vld [vmem:[#allocation7 + $0x68] sm:$0xff]
    %v151 = vld [vmem:[#allocation7 + $0x70] sm:$0xff]
    %v152 = vld [vmem:[#allocation7 + $0x78] sm:$0xff]
    %v153 = vlaneseq
    %v154 = vshrl.u32 %v153, 7
    %v155 = vsub.s32 1, %v154
    %v156 = vrot.slane %v55, %v155
    %157 = vmatprep.subr.mxu0 0.0
    %158 = vmatpush1.msra.mxu0 %v152
    %159 = vmatprep.subr.mxu0 0.0
    %160 = vmatpush1.msra.mxu0 %v151
    %161 = vmatprep.subr.mxu0 0.0
    %162 = vmatpush1.msra.mxu0 %v150
    %163 = vmatprep.subr.mxu0 0.0
    %164 = vmatpush1.msra.mxu0 %v149
    %165 = vmatprep.subr.mxu0 0.0
    %166 = vmatpush1.msra.mxu0 %v148
    %167 = vmatprep.subr.mxu0 0.0
    %168 = vmatpush1.msra.mxu0 %v147
    %169 = vmatprep.subr.mxu0 0.0
    %170 = vmatpush1.msra.mxu0 %v146
    %171 = vmatprep.subr.mxu0 0.0
    %172 = vmatpush1.msra.mxu0 %v145
    %173 = vmatprep.subr.mxu0 0.0
    %174 = vmatpush1.msra.mxu0 %v144
    %175 = vmatprep.subr.mxu0 0.0
    %176 = vmatpush1.msra.mxu0 %v143
    %177 = vmatprep.subr.mxu0 0.0
    %178 = vmatpush1.msra.mxu0 %v142
    %179 = vmatprep.subr.mxu0 0.0
    %180 = vmatpush1.msra.mxu0 %v141
    %181 = vmatprep.subr.mxu0 0.0
    %182 = vmatpush1.msra.mxu0 %v140
    %183 = vmatprep.subr.mxu0 0.0
    %184 = vmatpush1.msra.mxu0 %v139
    %185 = vmatprep.subr.mxu0 0.0
    %186 = vmatpush1.msra.mxu0 %v138
    %187 = vmatprep.subr.mxu0 0.0
    %188 = vmatpush1.msra.mxu0 %v137
    %189 = vmatprep.subr.mxu0 0.0
    %190 = vmatpush2.msra.mxu0 0.0
    %191 = vmatprep.subr.mxu0 0.0
    %192 = vmatpush2.msra.mxu0 0.0
    %193 = vmatprep.subr.mxu0 0.0
    %194 = vmatpush2.msra.mxu0 0.0
    %195 = vmatprep.subr.mxu0 0.0
    %196 = vmatpush2.msra.mxu0 0.0
    %197 = vmatprep.subr.mxu0 0.0
    %198 = vmatpush2.msra.mxu0 0.0
    %199 = vmatprep.subr.mxu0 0.0
    %200 = vmatpush2.msra.mxu0 0.0
    %201 = vmatprep.subr.mxu0 0.0
    %202 = vmatpush2.msra.mxu0 0.0
    %203 = vmatprep.subr.mxu0 0.0
    %204 = vmatpush2.msra.mxu0 0.0
    %205 = vmatprep.subr.mxu0 0.0
    %206 = vmatpush2.msra.mxu0 0.0
    %207 = vmatprep.subr.mxu0 0.0
    %208 = vmatpush2.msra.mxu0 0.0
    %209 = vmatprep.subr.mxu0 0.0
    %210 = vmatpush2.msra.mxu0 0.0
    %211 = vmatprep.subr.mxu0 0.0
    %212 = vmatpush2.msra.mxu0 0.0
    %213 = vmatprep.subr.mxu0 0.0
    %214 = vmatpush2.msra.mxu0 0.0
    %215 = vmatprep.subr.mxu0 0.0
    %216 = vmatpush2.msra.mxu0 0.0
    %217 = vmatprep.subr.mxu0 0.0
    %218 = vmatpush2.msra.mxu0 0.0
    %219 = vmatprep.subr.mxu0 0.0
    %220 = vmatpush2.msra.mxu0 0.0
    %221 = vmatprep.mubr.f32.mxu0 0.0
    %222 = vmatmul.mubr.f32.gmra.mxu0 %v136
    %v223 = vpop.f32.mrf.mxu0
    %v224 = vadd.f32 %v156, %v223
    %v225 = vpop.f32.mrf.mxu0
    %226 = vdwg.mxu0
    %v227 = vtanh.pop %v224
    %s228 = scalar_lea.vmem [#allocation7], 128
    %v229 = vld [vmem:[%s228] sm:$0xff]
    %v230 = vld [vmem:[%s228 + $0x8] sm:$0xff]
    %v231 = vld [vmem:[%s228 + $0x10] sm:$0xff]
    %v232 = vld [vmem:[%s228 + $0x18] sm:$0xff]
    %v233 = vld [vmem:[%s228 + $0x20] sm:$0xff]
    %v234 = vld [vmem:[%s228 + $0x28] sm:$0xff]
    %v235 = vld [vmem:[%s228 + $0x30] sm:$0xff]
    %v236 = vld [vmem:[%s228 + $0x38] sm:$0xff]
    %v237 = vld [vmem:[%s228 + $0x40] sm:$0xff]
    %v238 = vld [vmem:[%s228 + $0x48] sm:$0xff]
    %v239 = vld [vmem:[%s228 + $0x50] sm:$0xff]
    %v240 = vld [vmem:[%s228 + $0x58] sm:$0xff]
    %v241 = vld [vmem:[%s228 + $0x60] sm:$0xff]
    %v242 = vld [vmem:[%s228 + $0x68] sm:$0xff]
    %v243 = vld [vmem:[%s228 + $0x70] sm:$0xff]
    %v244 = vld [vmem:[%s228 + $0x78] sm:$0xff]
    %v245 = vlaneseq
    %v246 = vshrl.u32 %v245, 7
    %v247 = vsub.s32 2, %v246
    %v248 = vrot.slane %v55, %v247
    %249 = vmatprep.subr.mxu0 0.0
    %250 = vmatpush1.msra.mxu0 %v244
    %251 = vmatprep.subr.mxu0 0.0
    %252 = vmatpush1.msra.mxu0 %v243
    %253 = vmatprep.subr.mxu0 0.0
    %254 = vmatpush1.msra.mxu0 %v242
    %255 = vmatprep.subr.mxu0 0.0
    %256 = vmatpush1.msra.mxu0 %v241
    %257 = vmatprep.subr.mxu0 0.0
    %258 = vmatpush1.msra.mxu0 %v240
    %259 = vmatprep.subr.mxu0 0.0
    %260 = vmatpush1.msra.mxu0 %v239
    %261 = vmatprep.subr.mxu0 0.0
    %262 = vmatpush1.msra.mxu0 %v238
    %263 = vmatprep.subr.mxu0 0.0
    %264 = vmatpush1.msra.mxu0 %v237
    %265 = vmatprep.subr.mxu0 0.0
    %266 = vmatpush1.msra.mxu0 %v236
    %267 = vmatprep.subr.mxu0 0.0
    %268 = vmatpush1.msra.mxu0 %v235
    %269 = vmatprep.subr.mxu0 0.0
    %270 = vmatpush1.msra.mxu0 %v234
    %271 = vmatprep.subr.mxu0 0.0
    %272 = vmatpush1.msra.mxu0 %v233
    %273 = vmatprep.subr.mxu0 0.0
    %274 = vmatpush1.msra.mxu0 %v232
    %275 = vmatprep.subr.mxu0 0.0
    %276 = vmatpush1.msra.mxu0 %v231
    %277 = vmatprep.subr.mxu0 0.0
    %278 = vmatpush1.msra.mxu0 %v230
    %279 = vmatprep.subr.mxu0 0.0
    %280 = vmatpush1.msra.mxu0 %v229
    %281 = vmatprep.subr.mxu0 0.0
    %282 = vmatpush2.msra.mxu0 0.0
    %283 = vmatprep.subr.mxu0 0.0
    %284 = vmatpush2.msra.mxu0 0.0
    %285 = vmatprep.subr.mxu0 0.0
    %286 = vmatpush2.msra.mxu0 0.0
    %287 = vmatprep.subr.mxu0 0.0
    %288 = vmatpush2.msra.mxu0 0.0
    %289 = vmatprep.subr.mxu0 0.0
    %290 = vmatpush2.msra.mxu0 0.0
    %291 = vmatprep.subr.mxu0 0.0
    %292 = vmatpush2.msra.mxu0 0.0
    %293 = vmatprep.subr.mxu0 0.0
    %294 = vmatpush2.msra.mxu0 0.0
    %295 = vmatprep.subr.mxu0 0.0
    %296 = vmatpush2.msra.mxu0 0.0
    %297 = vmatprep.subr.mxu0 0.0
    %298 = vmatpush2.msra.mxu0 0.0
    %299 = vmatprep.subr.mxu0 0.0
    %300 = vmatpush2.msra.mxu0 0.0
    %301 = vmatprep.subr.mxu0 0.0
    %302 = vmatpush2.msra.mxu0 0.0
    %303 = vmatprep.subr.mxu0 0.0
    %304 = vmatpush2.msra.mxu0 0.0
    %305 = vmatprep.subr.mxu0 0.0
    %306 = vmatpush2.msra.mxu0 0.0
    %307 = vmatprep.subr.mxu0 0.0
    %308 = vmatpush2.msra.mxu0 0.0
    %309 = vmatprep.subr.mxu0 0.0
    %310 = vmatpush2.msra.mxu0 0.0
    %311 = vmatprep.subr.mxu0 0.0
    %312 = vmatpush2.msra.mxu0 0.0
    %313 = vmatprep.mubr.f32.mxu0 0.0
    %314 = vmatmul.mubr.f32.gmra.mxu0 %v227
    %v315 = vpop.f32.mrf.mxu0
    %v316 = vadd.f32 %v248, %v315
    %v317 = vpop.f32.mrf.mxu0
    %318 = vdwg.mxu0
    %319 = vst [vmem:[#allocation8] sm:$0xff] %v316
    // Predicated region
    $region30: #{tpu_custom_call.1} parent=1 // pred_check
      _
    $region31: #{tpu_custom_call.1} parent=1 // pred_check_branch
      %321 = sbr.rel (0) target = $region33
    $region32: #{tpu_custom_call.1} parent=1 // pred_region
      %s323 = ssub.s32 128, 128
      %324 = vsyncadd [#allocation4], %s323
      %s326 = sshll.u32 [#allocation8], 4
      %s327 = int_to_ptr.vmem [resolvable:$true] %s326
      %329 = dma.vmem_to_hbm [thread:$0]  %s327, 128, %s4, [#allocation4]
    $region33: #{tpu_custom_call.1} parent=1 // pred_fallthru
      _
    // Predicated region
    $region34: #{tpu_custom_call.1} parent=1 // pred_check
      _
    $region35: #{tpu_custom_call.1} parent=1 // pred_check_branch
      %331 = sbr.rel (0) target = $region37
    $region36: #{tpu_custom_call.1} parent=1 // pred_region
      %332 = dma.done [#allocation4], 128
    $region37: #{tpu_custom_call.1} parent=1 // pred_fallthru
      _
    %333 = vsyncpa [#allocation3], 1
    %334 = vsyncpa [#allocation6], 1
    %335 = vsyncpa [#allocation4], 1

</llo_original>
